<compile_context>
chip_gen: v5e
topology: v5e:2x2
jax: 0.10.0
libtpu: 0.0.40
codegen_flags: <defaults>
</compile_context>

<pallas_src>
import functools

import jax
import jax.numpy as jnp
from jax.experimental import pallas as pl
from jax.experimental.pallas import tpu as pltpu


def _round_up(x, m):
    return (x + m - 1) // m * m


def _pad_to(a, shape):
    pads = [(0, t - s) for s, t in zip(a.shape, shape)]
    return jnp.pad(a, pads)


def dueling_dqn_kernel(
    x_ref,    # [TB, S_pad]   bf16
    w1_ref,   # [S_pad, H_pad] bf16
    b1_ref,   # [1, H_pad]     f32
    w2_ref,   # [H_pad, H_pad] bf16
    b2_ref,   # [1, H_pad]     f32
    wh_ref,   # [H_pad, HEAD]  bf16 (advantages in [:A], value at column A_pad)
    bh_ref,   # [1, HEAD]      f32
    q_ref,    # [TB, A_pad]    f32 output
    *,
    a_pad,    # static: padded action width (multiple of 128)
    inv_a,    # static: 1.0 / action_size
):
    x = x_ref[...]

    # feature_layer: Linear -> ReLU -> Linear -> ReLU (f32 accumulate, f32 elementwise)
    h1 = jnp.dot(x, w1_ref[...], preferred_element_type=jnp.float32) + b1_ref[...]
    h1 = jnp.maximum(h1, 0.0)
    h2 = jnp.dot(h1.astype(w2_ref.dtype), w2_ref[...],
                 preferred_element_type=jnp.float32) + b2_ref[...]
    h2 = jnp.maximum(h2, 0.0)

    # fused value + advantage head: single MXU pass
    head = jnp.dot(h2.astype(wh_ref.dtype), wh_ref[...],
                   preferred_element_type=jnp.float32) + bh_ref[...]

    adv = head[:, :a_pad]            # [TB, A_pad]  (padding columns are exact zeros)
    val = head[:, a_pad:a_pad + 1]   # [TB, 1]      value column (tile-aligned slice)

    # dueling combine: Q = V + (A - mean(A));  mean = sum * (1/A), padding adds 0.
    adv_mean = jnp.sum(adv, axis=1, keepdims=True) * inv_a
    q_ref[...] = (val + (adv - adv_mean)).astype(q_ref.dtype)


def prepare_params(params, state_size, action_size, hidden_dim):
    """Pad + transpose-free weight prep: bf16 weights, f32 biases, fused head."""
    s_pad = _round_up(state_size, 128)
    h_pad = _round_up(hidden_dim, 128)
    a_pad = _round_up(action_size, 128)
    head = a_pad + 128  # advantages in lanes [0, A), value at lane a_pad

    w1 = _pad_to(params["w1"].astype(jnp.bfloat16), (s_pad, h_pad))
    b1 = _pad_to(params["b1"].astype(jnp.float32), (1, h_pad))
    w2 = _pad_to(params["w2"].astype(jnp.bfloat16), (h_pad, h_pad))
    b2 = _pad_to(params["b2"].astype(jnp.float32), (1, h_pad))

    wh = jnp.zeros((h_pad, head), jnp.bfloat16)
    wh = wh.at[:hidden_dim, :action_size].set(params["wa"].astype(jnp.bfloat16))
    wh = wh.at[:hidden_dim, a_pad].set(params["wv"][:, 0].astype(jnp.bfloat16))
    bh = jnp.zeros((1, head), jnp.float32)
    bh = bh.at[:, :action_size].set(params["ba"].astype(jnp.float32))
    bh = bh.at[:, a_pad].set(params["bv"][0, 0].astype(jnp.float32))

    return {
        "w1": w1, "b1": b1, "w2": w2, "b2": b2, "wh": wh, "bh": bh,
        "S": state_size, "A": action_size,
        "S_pad": s_pad, "H_pad": h_pad, "A_pad": a_pad, "HEAD": head,
    }


def dueling_dqn_forward(x, prep):
    """x: [B, state_size] float32. prep: output of prepare_params."""
    B = x.shape[0]
    S, A = prep["S"], prep["A"]
    s_pad, h_pad, a_pad, head = prep["S_pad"], prep["H_pad"], prep["A_pad"], prep["HEAD"]

    # Batch tiling: big tiles amortize per-step overhead; small batches use one tile.
    tb = min(512, _round_up(B, 8))
    b_pad = _round_up(B, tb)
    grid = (b_pad // tb,)

    # Lane-dense, bf16 input slab.
    x_p = jnp.zeros((b_pad, s_pad), jnp.bfloat16)
    x_p = x_p.at[:B, :S].set(x.astype(jnp.bfloat16))

    kernel = functools.partial(dueling_dqn_kernel, a_pad=a_pad, inv_a=1.0 / A)

    q_pad = pl.pallas_call(
        kernel,
        out_shape=jax.ShapeDtypeStruct((b_pad, a_pad), jnp.float32),
        grid=grid,
        in_specs=[
            pl.BlockSpec((tb, s_pad), lambda i: (i, 0)),     # x: tiled over batch
            pl.BlockSpec((s_pad, h_pad), lambda i: (0, 0)),  # w1: resident
            pl.BlockSpec((1, h_pad), lambda i: (0, 0)),      # b1: resident
            pl.BlockSpec((h_pad, h_pad), lambda i: (0, 0)),  # w2: resident
            pl.BlockSpec((1, h_pad), lambda i: (0, 0)),      # b2: resident
            pl.BlockSpec((h_pad, head), lambda i: (0, 0)),   # fused head weight
            pl.BlockSpec((1, head), lambda i: (0, 0)),       # fused head bias
        ],
        out_specs=pl.BlockSpec((tb, a_pad), lambda i: (i, 0)),
        compiler_params=pltpu.CompilerParams(
            dimension_semantics=("parallel",)),
    )(x_p, prep["w1"], prep["b1"], prep["w2"], prep["b2"], prep["wh"], prep["bh"])

    return q_pad[:B, :A]


def init_params(key, state_size, action_size, hidden_dim):
    """Deterministic synthetic init. Weights stored as [in, out] (pre-transposed)."""
    ks = jax.random.split(key, 8)

    def lin(kw, kb, fan_in, fan_out):
        bound = 1.0 / jnp.sqrt(fan_in)
        w = jax.random.uniform(kw, (fan_in, fan_out), jnp.float32, -bound, bound)
        b = jax.random.uniform(kb, (1, fan_out), jnp.float32, -bound, bound)
        return w, b

    w1, b1 = lin(ks[0], ks[1], state_size, hidden_dim)
    w2, b2 = lin(ks[2], ks[3], hidden_dim, hidden_dim)
    wv, bv = lin(ks[4], ks[5], hidden_dim, 1)
    wa, ba = lin(ks[6], ks[7], hidden_dim, action_size)
    return {"w1": w1, "b1": b1, "w2": w2, "b2": b2,
            "wv": wv, "bv": bv, "wa": wa, "ba": ba}


def reference_forward(x, p):
    """Pure-JAX reference with the SAME bf16 operands / f32 accumulation."""
    def mm(a, w):
        return jnp.dot(a.astype(jnp.bfloat16), w.astype(jnp.bfloat16),
                       preferred_element_type=jnp.float32)

    h1 = jnp.maximum(mm(x, p["w1"]) + p["b1"], 0.0)
    h2 = jnp.maximum(mm(h1, p["w2"]) + p["b2"], 0.0)
    v = mm(h2, p["wv"]) + p["bv"]
    a = mm(h2, p["wa"]) + p["ba"]
    return v + (a - jnp.mean(a, axis=1, keepdims=True))


if __name__ == "__main__":
    batch = 2
    state_size = 16
    action_size = 8
    hidden_dim = 32

    key = jax.random.PRNGKey(0)
    k_x, k_p = jax.random.split(key)

    x = jax.random.normal(k_x, (batch, state_size), jnp.float32)
    params = init_params(k_p, state_size, action_size, hidden_dim)

    prep = prepare_params(params, state_size, action_size, hidden_dim)
    q = dueling_dqn_forward(x, prep)
    q = jax.block_until_ready(q)

    q_ref = reference_forward(x, params)
    assert q.shape == (batch, action_size)
    assert jnp.allclose(q, q_ref, atol=1e-3, rtol=1e-3), (
        f"max abs err {jnp.max(jnp.abs(q - q_ref))}")

    print("KERNEL_OK")
</pallas_src>

<mosaic_0001>
module attributes {stable_mosaic.version = 11 : i64} {
  func.func @dueling_dqn_kernel(%arg0: i32, %arg1: memref<8x128xbf16, #tpu.memory_space<vmem>>, %arg2: memref<128x128xbf16, #tpu.memory_space<vmem>>, %arg3: memref<1x128xf32, #tpu.memory_space<vmem>>, %arg4: memref<128x128xbf16, #tpu.memory_space<vmem>>, %arg5: memref<1x128xf32, #tpu.memory_space<vmem>>, %arg6: memref<128x256xbf16, #tpu.memory_space<vmem>>, %arg7: memref<1x256xf32, #tpu.memory_space<vmem>>, %arg8: memref<8x128xf32, #tpu.memory_space<vmem>>) attributes {dimension_semantics = [#tpu.dimension_semantics<parallel>], iteration_bounds = array<i64: 1>, scalar_prefetch = 0 : i64, scratch_operands = 0 : i64, tpu.core_type = #tpu.core_type<tc>, window_params = [{transform_indices = @transform_0, window_bounds = array<i64: 8, 128>}, {pipeline_mode = #tpu.pipeline_mode<synchronous>, transform_indices = @transform_1, window_bounds = array<i64: 128, 128>}, {pipeline_mode = #tpu.pipeline_mode<synchronous>, transform_indices = @transform_2, window_bounds = array<i64: 1, 128>}, {pipeline_mode = #tpu.pipeline_mode<synchronous>, transform_indices = @transform_3, window_bounds = array<i64: 128, 128>}, {pipeline_mode = #tpu.pipeline_mode<synchronous>, transform_indices = @transform_4, window_bounds = array<i64: 1, 128>}, {pipeline_mode = #tpu.pipeline_mode<synchronous>, transform_indices = @transform_5, window_bounds = array<i64: 128, 256>}, {pipeline_mode = #tpu.pipeline_mode<synchronous>, transform_indices = @transform_6, window_bounds = array<i64: 1, 256>}, {transform_indices = @transform_7, window_bounds = array<i64: 8, 128>}]} {
    %c0 = arith.constant 0 : index
    %c0_0 = arith.constant 0 : index
    %0 = vector.load %arg1[%c0, %c0_0] : memref<8x128xbf16, #tpu.memory_space<vmem>>, vector<8x128xbf16>
    %c0_1 = arith.constant 0 : index
    %c0_2 = arith.constant 0 : index
    %1 = vector.load %arg2[%c0_1, %c0_2] : memref<128x128xbf16, #tpu.memory_space<vmem>>, vector<128x128xbf16>
    %cst = arith.constant dense<0.000000e+00> : vector<8x128xf32>
    %2 = tpu.matmul %0, %1, %cst {dimension_numbers = #tpu.dot_dimension_numbers<[1], [0], [0], [1], [0, 0, 1, 1], [], []>} : vector<8x128xbf16>, vector<128x128xbf16>, vector<8x128xf32> -> vector<8x128xf32>
    %c0_3 = arith.constant 0 : index
    %c0_4 = arith.constant 0 : index
    %3 = vector.load %arg3[%c0_3, %c0_4] : memref<1x128xf32, #tpu.memory_space<vmem>>, vector<1x128xf32>
    %4 = vector.broadcast %3 : vector<1x128xf32> to vector<8x128xf32>
    %5 = arith.addf %2, %4 : vector<8x128xf32>
    %cst_5 = arith.constant 0.000000e+00 : f32
    %6 = vector.broadcast %cst_5 : f32 to vector<8x128xf32>
    %7 = arith.maximumf %5, %6 : vector<8x128xf32>
    %8 = arith.truncf %7 : vector<8x128xf32> to vector<8x128xbf16>
    %c0_6 = arith.constant 0 : index
    %c0_7 = arith.constant 0 : index
    %9 = vector.load %arg4[%c0_6, %c0_7] : memref<128x128xbf16, #tpu.memory_space<vmem>>, vector<128x128xbf16>
    %cst_8 = arith.constant dense<0.000000e+00> : vector<8x128xf32>
    %10 = tpu.matmul %8, %9, %cst_8 {dimension_numbers = #tpu.dot_dimension_numbers<[1], [0], [0], [1], [0, 0, 1, 1], [], []>} : vector<8x128xbf16>, vector<128x128xbf16>, vector<8x128xf32> -> vector<8x128xf32>
    %c0_9 = arith.constant 0 : index
    %c0_10 = arith.constant 0 : index
    %11 = vector.load %arg5[%c0_9, %c0_10] : memref<1x128xf32, #tpu.memory_space<vmem>>, vector<1x128xf32>
    %12 = vector.broadcast %11 : vector<1x128xf32> to vector<8x128xf32>
    %13 = arith.addf %10, %12 : vector<8x128xf32>
    %cst_11 = arith.constant 0.000000e+00 : f32
    %14 = vector.broadcast %cst_11 : f32 to vector<8x128xf32>
    %15 = arith.maximumf %13, %14 : vector<8x128xf32>
    %16 = arith.truncf %15 : vector<8x128xf32> to vector<8x128xbf16>
    %c0_12 = arith.constant 0 : index
    %c0_13 = arith.constant 0 : index
    %17 = vector.load %arg6[%c0_12, %c0_13] : memref<128x256xbf16, #tpu.memory_space<vmem>>, vector<128x256xbf16>
    %cst_14 = arith.constant dense<0.000000e+00> : vector<8x256xf32>
    %18 = tpu.matmul %16, %17, %cst_14 {dimension_numbers = #tpu.dot_dimension_numbers<[1], [0], [0], [1], [0, 0, 1, 1], [], []>} : vector<8x128xbf16>, vector<128x256xbf16>, vector<8x256xf32> -> vector<8x256xf32>
    %c0_15 = arith.constant 0 : index
    %c0_16 = arith.constant 0 : index
    %19 = vector.load %arg7[%c0_15, %c0_16] : memref<1x256xf32, #tpu.memory_space<vmem>>, vector<1x256xf32>
    %20 = vector.broadcast %19 : vector<1x256xf32> to vector<8x256xf32>
    %21 = arith.addf %18, %20 : vector<8x256xf32>
    %22 = vector.extract_strided_slice %21 {offsets = [0, 0], sizes = [8, 128], strides = [1, 1]} : vector<8x256xf32> to vector<8x128xf32>
    %23 = vector.extract_strided_slice %21 {offsets = [0, 128], sizes = [8, 1], strides = [1, 1]} : vector<8x256xf32> to vector<8x1xf32>
    %cst_17 = arith.constant dense<0.000000e+00> : vector<8xf32>
    %24 = vector.multi_reduction <add>, %22, %cst_17 [1] : vector<8x128xf32> to vector<8xf32>
    %25 = vector.shape_cast %24 : vector<8xf32> to vector<8x1xf32>
    %cst_18 = arith.constant 1.250000e-01 : f32
    %26 = vector.broadcast %cst_18 : f32 to vector<8x1xf32>
    %27 = arith.mulf %25, %26 : vector<8x1xf32>
    %28 = vector.broadcast %27 : vector<8x1xf32> to vector<8x128xf32>
    %29 = arith.subf %22, %28 : vector<8x128xf32>
    %30 = vector.broadcast %23 : vector<8x1xf32> to vector<8x128xf32>
    %31 = arith.addf %30, %29 : vector<8x128xf32>
    %c0_19 = arith.constant 0 : index
    %c0_20 = arith.constant 0 : index
    %32 = vector.load %arg8[%c0_19, %c0_20] : memref<8x128xf32, #tpu.memory_space<vmem>>, vector<8x128xf32>
    tpu.vector_store %arg8[%c0_19, %c0_20], %31 {strides = array<i32>} : memref<8x128xf32, #tpu.memory_space<vmem>>, vector<8x128xf32>,
    return
  }
  func.func @transform_0(%arg0: i32) -> (i32, i32) {
    %c0_i32 = arith.constant 0 : i32
    %c0_i32_0 = arith.constant 0 : i32
    return %arg0, %c0_i32 : i32, i32
  }
  func.func @transform_1(%arg0: i32) -> (i32, i32) {
    %c0_i32 = arith.constant 0 : i32
    %c0_i32_0 = arith.constant 0 : i32
    %c0_i32_1 = arith.constant 0 : i32
    return %c0_i32, %c0_i32_0 : i32, i32
  }
  func.func @transform_2(%arg0: i32) -> (i32, i32) {
    %c0_i32 = arith.constant 0 : i32
    %c0_i32_0 = arith.constant 0 : i32
    %c0_i32_1 = arith.constant 0 : i32
    return %c0_i32, %c0_i32_0 : i32, i32
  }
  func.func @transform_3(%arg0: i32) -> (i32, i32) {
    %c0_i32 = arith.constant 0 : i32
    %c0_i32_0 = arith.constant 0 : i32
    %c0_i32_1 = arith.constant 0 : i32
    return %c0_i32, %c0_i32_0 : i32, i32
  }
  func.func @transform_4(%arg0: i32) -> (i32, i32) {
    %c0_i32 = arith.constant 0 : i32
    %c0_i32_0 = arith.constant 0 : i32
    %c0_i32_1 = arith.constant 0 : i32
    return %c0_i32, %c0_i32_0 : i32, i32
  }
  func.func @transform_5(%arg0: i32) -> (i32, i32) {
    %c0_i32 = arith.constant 0 : i32
    %c0_i32_0 = arith.constant 0 : i32
    %c0_i32_1 = arith.constant 0 : i32
    return %c0_i32, %c0_i32_0 : i32, i32
  }
  func.func @transform_6(%arg0: i32) -> (i32, i32) {
    %c0_i32 = arith.constant 0 : i32
    %c0_i32_0 = arith.constant 0 : i32
    %c0_i32_1 = arith.constant 0 : i32
    return %c0_i32, %c0_i32_0 : i32, i32
  }
  func.func @transform_7(%arg0: i32) -> (i32, i32) {
    %c0_i32 = arith.constant 0 : i32
    %c0_i32_0 = arith.constant 0 : i32
    return %arg0, %c0_i32 : i32, i32
  }
}

</mosaic_0001>

<llo_original>
// kernel: tpu_custom_call.1
$region0: #{tpu_custom_call.1}
  #allocation0 [shape = 'u32[]', space=smem, size = 0x4, offset = 0x4, fixed_abs, tag = 'smem constant byte address 0x4 - core index']
  #allocation1 [shape = 'u32[72,128]{1,0:T(1,128)}', space=vmem, size = 0x9000, scoped, tag = 'internal scratch']
  %s0 = inlined_call_operand.hbm [shape: bf16[8,128], index: 0, kind: input, shape index: {}]
  %s1 = inlined_call_operand.hbm [shape: bf16[128,128], index: 1, kind: input, shape index: {}]
  %s2 = inlined_call_operand.vmem [shape: f32[1,128], index: 2, kind: input, shape index: {}]
  %s3 = inlined_call_operand.hbm [shape: bf16[128,128], index: 3, kind: input, shape index: {}]
  %s4 = inlined_call_operand.hbm [shape: f32[1,128], index: 4, kind: input, shape index: {}]
  %s5 = inlined_call_operand.hbm [shape: bf16[128,256], index: 5, kind: input, shape index: {}]
  %s6 = inlined_call_operand.vmem [shape: f32[1,256], index: 6, kind: input, shape index: {}]
  %s7 = inlined_call_operand.hbm [shape: f32[8,128], index: 7, kind: output, shape index: {}]
  %s8 = sld [smem:[#allocation0]]
  $region58: #{tpu_custom_call.1} parent=0
    _
  %s10 = ssub.s32 1, %s8
  %s11 = scalar_select 0, %s10, %s8
  $region1: #{tpu_custom_call.1} parent=0
    #allocation2 [shape = 'u8[2048]{0}', space=vmem, size = 0x800, scoped, tag = 'input window, operand 0, single buffered']
    #allocation3 [shape = 's32[1]{0}', space=sflag, size = 0x4, scoped, tag = 'scoped memory for tpu_custom_call.1']
    #allocation4 [shape = 's32[1]{0}', space=sflag, size = 0x4, scoped, tag = 'scoped memory for tpu_custom_call.1']
    #allocation5 [shape = 'u8[32768]{0}', space=vmem, size = 0x8000, scoped, tag = 'input window, operand 1, single buffered']
    #allocation6 [shape = 's32[1]{0}', space=sflag, size = 0x4, scoped, tag = 'scoped memory for tpu_custom_call.1']
    #allocation7 [shape = 'u8[32768]{0}', space=vmem, size = 0x8000, scoped, tag = 'input window, operand 3, single buffered']
    #allocation8 [shape = 'u8[512]{0}', space=vmem, size = 0x400, scoped, tag = 'input window, operand 4, single buffered']
    #allocation9 [shape = 's32[1]{0}', space=sflag, size = 0x4, scoped, tag = 'scoped memory for tpu_custom_call.1']
    #allocation10 [shape = 'u8[65536]{0}', space=vmem, size = 0x10000, scoped, tag = 'input window, operand 5, single buffered']
    #allocation11 [shape = 'u8[4096]{0}', space=vmem, size = 0x1000, scoped, tag = 'output window, operand 0, single buffered']
    %12 = vsyncpa [#allocation3], 0
    %13 = vsyncpa [#allocation6], 0
    %14 = vsyncpa [#allocation9], 0
    %15 = vsyncpa [#allocation4], 0
    // Predicated region
    $region2: #{tpu_custom_call.1} parent=1 // pred_check
      _
    $region3: #{tpu_custom_call.1} parent=1 // pred_check_branch
      %17 = sbr.rel (0) target = $region5
    $region4: #{tpu_custom_call.1} parent=1 // pred_region
      %19 = vsyncadd [#allocation3], 0
      %s21 = sshll.u32 %s0, 4
      %s22 = int_to_ptr.hbm [resolvable:$true] %s21
      %s23 = sshll.u32 [#allocation2], 4
      %s24 = int_to_ptr.vmem [resolvable:$true] %s23
      %26 = dma.hbm_to_vmem [thread:$0]  %s22, 64, %s24, [#allocation3]
    $region5: #{tpu_custom_call.1} parent=1 // pred_fallthru
      _
    // Predicated region
    $region6: #{tpu_custom_call.1} parent=1 // pred_check
      _
    $region7: #{tpu_custom_call.1} parent=1 // pred_check_branch
      %28 = sbr.rel (0) target = $region9
    $region8: #{tpu_custom_call.1} parent=1 // pred_region
      %30 = vsyncadd [#allocation6], 0
      %s31 = sshll.u32 %s1, 4
      %s32 = int_to_ptr.hbm [resolvable:$true] %s31
      %s33 = sshll.u32 [#allocation5], 4
      %s34 = int_to_ptr.vmem [resolvable:$true] %s33
      %39 = dma.hbm_to_vmem [thread:$0]  %s32, 1024, %s34, [#allocation6], 64, 64, 4
    $region9: #{tpu_custom_call.1} parent=1 // pred_fallthru
      _
    // Predicated region
    $region10: #{tpu_custom_call.1} parent=1 // pred_check
      _
    $region11: #{tpu_custom_call.1} parent=1 // pred_check_branch
      %41 = sbr.rel (0) target = $region13
    $region12: #{tpu_custom_call.1} parent=1 // pred_region
      _
    $region13: #{tpu_custom_call.1} parent=1 // pred_fallthru
      _
    // Predicated region
    $region14: #{tpu_custom_call.1} parent=1 // pred_check
      _
    $region15: #{tpu_custom_call.1} parent=1 // pred_check_branch
      %43 = sbr.rel (0) target = $region17
    $region16: #{tpu_custom_call.1} parent=1 // pred_region
      %45 = vsyncadd [#allocation6], 0
      %s46 = sshll.u32 %s3, 4
      %s47 = int_to_ptr.hbm [resolvable:$true] %s46
      %s48 = sshll.u32 [#allocation7], 4
      %s49 = int_to_ptr.vmem [resolvable:$true] %s48
      %54 = dma.hbm_to_vmem [thread:$0]  %s47, 1024, %s49, [#allocation6], 64, 64, 4
    $region17: #{tpu_custom_call.1} parent=1 // pred_fallthru
      _
    // Predicated region
    $region18: #{tpu_custom_call.1} parent=1 // pred_check
      _
    $region19: #{tpu_custom_call.1} parent=1 // pred_check_branch
      %56 = sbr.rel (0) target = $region21
    $region20: #{tpu_custom_call.1} parent=1 // pred_region
      %58 = vsyncadd [#allocation9], 0
      %s60 = sshll.u32 %s4, 4
      %s61 = int_to_ptr.hbm [resolvable:$true] %s60
      %s62 = sshll.u32 [#allocation8], 4
      %s63 = int_to_ptr.vmem [resolvable:$true] %s62
      %65 = dma.hbm_to_vmem [thread:$0]  %s61, 16, %s63, [#allocation9]
    $region21: #{tpu_custom_call.1} parent=1 // pred_fallthru
      _
    // Predicated region
    $region22: #{tpu_custom_call.1} parent=1 // pred_check
      _
    $region23: #{tpu_custom_call.1} parent=1 // pred_check_branch
      %67 = sbr.rel (0) target = $region25
    $region24: #{tpu_custom_call.1} parent=1 // pred_region
      %69 = vsyncadd [#allocation9], 0
      %s70 = sshll.u32 %s5, 4
      %s71 = int_to_ptr.hbm [resolvable:$true] %s70
      %s72 = sshll.u32 [#allocation10], 4
      %s73 = int_to_ptr.vmem [resolvable:$true] %s72
      %78 = dma.hbm_to_vmem [thread:$0]  %s71, 2048, %s73, [#allocation9], 128, 128, 8
    $region25: #{tpu_custom_call.1} parent=1 // pred_fallthru
      _
    // Predicated region
    $region26: #{tpu_custom_call.1} parent=1 // pred_check
      _
    $region27: #{tpu_custom_call.1} parent=1 // pred_check_branch
      %80 = sbr.rel (0) target = $region29
    $region28: #{tpu_custom_call.1} parent=1 // pred_region
      _
    $region29: #{tpu_custom_call.1} parent=1 // pred_fallthru
      _
    // Predicated region
    $region30: #{tpu_custom_call.1} parent=1 // pred_check
      _
    $region31: #{tpu_custom_call.1} parent=1 // pred_check_branch
      %82 = sbr.rel (0) target = $region33
    $region32: #{tpu_custom_call.1} parent=1 // pred_region
      %84 = dma.done [#allocation3], 64
    $region33: #{tpu_custom_call.1} parent=1 // pred_fallthru
      _
    // Predicated region
    $region34: #{tpu_custom_call.1} parent=1 // pred_check
      _
    $region35: #{tpu_custom_call.1} parent=1 // pred_check_branch
      %86 = sbr.rel (0) target = $region37
    $region36: #{tpu_custom_call.1} parent=1 // pred_region
      %88 = dma.done [#allocation6], 1024
    $region37: #{tpu_custom_call.1} parent=1 // pred_fallthru
      _
    // Predicated region
    $region38: #{tpu_custom_call.1} parent=1 // pred_check
      _
    $region39: #{tpu_custom_call.1} parent=1 // pred_check_branch
      %90 = sbr.rel (0) target = $region41
    $region40: #{tpu_custom_call.1} parent=1 // pred_region
      %92 = dma.done [#allocation6], 1024
    $region41: #{tpu_custom_call.1} parent=1 // pred_fallthru
      _
    // Predicated region
    $region42: #{tpu_custom_call.1} parent=1 // pred_check
      _
    $region43: #{tpu_custom_call.1} parent=1 // pred_check_branch
      %94 = sbr.rel (0) target = $region45
    $region44: #{tpu_custom_call.1} parent=1 // pred_region
      %96 = dma.done [#allocation9], 16
    $region45: #{tpu_custom_call.1} parent=1 // pred_fallthru
      _
    // Predicated region
    $region46: #{tpu_custom_call.1} parent=1 // pred_check
      _
    $region47: #{tpu_custom_call.1} parent=1 // pred_check_branch
      %98 = sbr.rel (0) target = $region49
    $region48: #{tpu_custom_call.1} parent=1 // pred_region
      %100 = dma.done [#allocation9], 2048
    $region49: #{tpu_custom_call.1} parent=1 // pred_fallthru
      _
    %v101 = vld [vmem:[#allocation2] sm:$0xf]
    %v102 = vld [vmem:[#allocation5] sm:$0xf]
    %v103 = vld [vmem:[#allocation5 + $0x4] sm:$0xf]
    %v104 = vld [vmem:[#allocation5 + $0x8] sm:$0xf]
    %v105 = vld [vmem:[#allocation5 + $0xc] sm:$0xf]
    %v106 = vld [vmem:[#allocation5 + $0x10] sm:$0xf]
    %v107 = vld [vmem:[#allocation5 + $0x14] sm:$0xf]
    %v108 = vld [vmem:[#allocation5 + $0x18] sm:$0xf]
    %v109 = vld [vmem:[#allocation5 + $0x1c] sm:$0xf]
    %v110 = vld [vmem:[#allocation5 + $0x20] sm:$0xf]
    %v111 = vld [vmem:[#allocation5 + $0x24] sm:$0xf]
    %v112 = vld [vmem:[#allocation5 + $0x28] sm:$0xf]
    %v113 = vld [vmem:[#allocation5 + $0x2c] sm:$0xf]
    %v114 = vld [vmem:[#allocation5 + $0x30] sm:$0xf]
    %v115 = vld [vmem:[#allocation5 + $0x34] sm:$0xf]
    %v116 = vld [vmem:[#allocation5 + $0x38] sm:$0xf]
    %v117 = vld [vmem:[#allocation5 + $0x3c] sm:$0xf]
    %v118 = vld [vmem:[%s2] sm:$0x1]
    %v120 = vperm.slane %v118, 0
    %v138 = vunpack.c.l.b16 %v102
    %v139 = vunpack.c.l.b16 %v103
    %v140 = vunpack.c.l.b16 %v104
    %v141 = vunpack.c.l.b16 %v105
    %v142 = vunpack.c.l.b16 %v106
    %v143 = vunpack.c.l.b16 %v107
    %v144 = vunpack.c.l.b16 %v108
    %v145 = vunpack.c.l.b16 %v109
    %v146 = vunpack.c.l.b16 %v110
    %v147 = vunpack.c.l.b16 %v111
    %v148 = vunpack.c.l.b16 %v112
    %v149 = vunpack.c.l.b16 %v113
    %v150 = vunpack.c.l.b16 %v114
    %v151 = vunpack.c.l.b16 %v115
    %v152 = vunpack.c.l.b16 %v116
    %v153 = vunpack.c.l.b16 %v117
    %v154 = vpack.c.b16 %v139, %v138
    %v155 = vpack.c.b16 %v141, %v140
    %v156 = vpack.c.b16 %v143, %v142
    %v157 = vpack.c.b16 %v145, %v144
    %v158 = vpack.c.b16 %v147, %v146
    %v159 = vpack.c.b16 %v149, %v148
    %v160 = vpack.c.b16 %v151, %v150
    %v161 = vpack.c.b16 %v153, %v152
    %170 = vmatpush.bf16.msra.mxu0 %v161
    %171 = vmatpush.bf16.msra.mxu0 %v160
    %172 = vmatpush.bf16.msra.mxu0 %v159
    %173 = vmatpush.bf16.msra.mxu0 %v158
    %174 = vmatpush.bf16.msra.mxu0 %v157
    %175 = vmatpush.bf16.msra.mxu0 %v156
    %176 = vmatpush.bf16.msra.mxu0 %v155
    %177 = vmatpush.bf16.msra.mxu0 %v154
    %178 = vmatmul.bf16.gmra.mxu0 %v101
    %v179 = vpop.f32.mrf.mxu0
    %v180 = vadd.f32 %v120, %v179
    %v181 = vpop.f32.mrf.mxu0
    %182 = vdwg.mxu0
    %v183 = vmax.f32 %v180, 0.0
    %v184 = vpack.c.bf16 %v183, %v183
    %v185 = vld [vmem:[#allocation7] sm:$0xf]
    %v186 = vld [vmem:[#allocation7 + $0x4] sm:$0xf]
    %v187 = vld [vmem:[#allocation7 + $0x8] sm:$0xf]
    %v188 = vld [vmem:[#allocation7 + $0xc] sm:$0xf]
    %v189 = vld [vmem:[#allocation7 + $0x10] sm:$0xf]
    %v190 = vld [vmem:[#allocation7 + $0x14] sm:$0xf]
    %v191 = vld [vmem:[#allocation7 + $0x18] sm:$0xf]
    %v192 = vld [vmem:[#allocation7 + $0x1c] sm:$0xf]
    %v193 = vld [vmem:[#allocation7 + $0x20] sm:$0xf]
    %v194 = vld [vmem:[#allocation7 + $0x24] sm:$0xf]
    %v195 = vld [vmem:[#allocation7 + $0x28] sm:$0xf]
    %v196 = vld [vmem:[#allocation7 + $0x2c] sm:$0xf]
    %v197 = vld [vmem:[#allocation7 + $0x30] sm:$0xf]
    %v198 = vld [vmem:[#allocation7 + $0x34] sm:$0xf]
    %v199 = vld [vmem:[#allocation7 + $0x38] sm:$0xf]
    %v200 = vld [vmem:[#allocation7 + $0x3c] sm:$0xf]
    %v201 = vld [vmem:[#allocation8] sm:$0x1]
    %v203 = vperm.slane %v201, 0
    %v221 = vunpack.c.l.b16 %v185
    %v222 = vunpack.c.l.b16 %v186
    %v223 = vunpack.c.l.b16 %v187
    %v224 = vunpack.c.l.b16 %v188
    %v225 = vunpack.c.l.b16 %v189
    %v226 = vunpack.c.l.b16 %v190
    %v227 = vunpack.c.l.b16 %v191
    %v228 = vunpack.c.l.b16 %v192
    %v229 = vunpack.c.l.b16 %v193
    %v230 = vunpack.c.l.b16 %v194
    %v231 = vunpack.c.l.b16 %v195
    %v232 = vunpack.c.l.b16 %v196
    %v233 = vunpack.c.l.b16 %v197
    %v234 = vunpack.c.l.b16 %v198
    %v235 = vunpack.c.l.b16 %v199
    %v236 = vunpack.c.l.b16 %v200
    %v237 = vpack.c.b16 %v222, %v221
    %v238 = vpack.c.b16 %v224, %v223
    %v239 = vpack.c.b16 %v226, %v225
    %v240 = vpack.c.b16 %v228, %v227
    %v241 = vpack.c.b16 %v230, %v229
    %v242 = vpack.c.b16 %v232, %v231
    %v243 = vpack.c.b16 %v234, %v233
    %v244 = vpack.c.b16 %v236, %v235
    %253 = vmatpush.bf16.msra.mxu0 %v244
    %254 = vmatpush.bf16.msra.mxu0 %v243
    %255 = vmatpush.bf16.msra.mxu0 %v242
    %256 = vmatpush.bf16.msra.mxu0 %v241
    %257 = vmatpush.bf16.msra.mxu0 %v240
    %258 = vmatpush.bf16.msra.mxu0 %v239
    %259 = vmatpush.bf16.msra.mxu0 %v238
    %260 = vmatpush.bf16.msra.mxu0 %v237
    %261 = vmatmul.bf16.gmra.mxu0 %v184
    %v262 = vpop.f32.mrf.mxu0
    %v263 = vadd.f32 %v203, %v262
    %v264 = vpop.f32.mrf.mxu0
    %265 = vdwg.mxu0
    %v266 = vmax.f32 %v263, 0.0
    %v267 = vpack.c.bf16 %v266, %v266
    %v268 = vld [vmem:[#allocation10] sm:$0xff]
    %v269 = vld [vmem:[#allocation10 + $0x8] sm:$0xff]
    %v270 = vld [vmem:[#allocation10 + $0x10] sm:$0xff]
    %v271 = vld [vmem:[#allocation10 + $0x18] sm:$0xff]
    %v272 = vld [vmem:[#allocation10 + $0x20] sm:$0xff]
    %v273 = vld [vmem:[#allocation10 + $0x28] sm:$0xff]
    %v274 = vld [vmem:[#allocation10 + $0x30] sm:$0xff]
    %v275 = vld [vmem:[#allocation10 + $0x38] sm:$0xff]
    %v276 = vld [vmem:[#allocation10 + $0x40] sm:$0xff]
    %v277 = vld [vmem:[#allocation10 + $0x48] sm:$0xff]
    %v278 = vld [vmem:[#allocation10 + $0x50] sm:$0xff]
    %v279 = vld [vmem:[#allocation10 + $0x58] sm:$0xff]
    %v280 = vld [vmem:[#allocation10 + $0x60] sm:$0xff]
    %v281 = vld [vmem:[#allocation10 + $0x68] sm:$0xff]
    %v282 = vld [vmem:[#allocation10 + $0x70] sm:$0xff]
    %v283 = vld [vmem:[#allocation10 + $0x78] sm:$0xff]
    %v284 = vld [vmem:[%s6] sm:$0x3]
    %v286 = vperm.slane %v284, 0
    %v287 = vperm.slane %v284, 1
    %v306 = vunpack.c.l.b16 %v268
    %v307 = vunpack.c.h.b16 %v268
    %v308 = vunpack.c.l.b16 %v269
    %v309 = vunpack.c.h.b16 %v269
    %v310 = vunpack.c.l.b16 %v270
    %v311 = vunpack.c.h.b16 %v270
    %v312 = vunpack.c.l.b16 %v271
    %v313 = vunpack.c.h.b16 %v271
    %v314 = vunpack.c.l.b16 %v272
    %v315 = vunpack.c.h.b16 %v272
    %v316 = vunpack.c.l.b16 %v273
    %v317 = vunpack.c.h.b16 %v273
    %v318 = vunpack.c.l.b16 %v274
    %v319 = vunpack.c.h.b16 %v274
    %v320 = vunpack.c.l.b16 %v275
    %v321 = vunpack.c.h.b16 %v275
    %v322 = vunpack.c.l.b16 %v276
    %v323 = vunpack.c.h.b16 %v276
    %v324 = vunpack.c.l.b16 %v277
    %v325 = vunpack.c.h.b16 %v277
    %v326 = vunpack.c.l.b16 %v278
    %v327 = vunpack.c.h.b16 %v278
    %v328 = vunpack.c.l.b16 %v279
    %v329 = vunpack.c.h.b16 %v279
    %v330 = vunpack.c.l.b16 %v280
    %v331 = vunpack.c.h.b16 %v280
    %v332 = vunpack.c.l.b16 %v281
    %v333 = vunpack.c.h.b16 %v281
    %v334 = vunpack.c.l.b16 %v282
    %v335 = vunpack.c.h.b16 %v282
    %v336 = vunpack.c.l.b16 %v283
    %v337 = vunpack.c.h.b16 %v283
    %v338 = vpack.c.b16 %v308, %v306
    %v339 = vpack.c.b16 %v309, %v307
    %v340 = vpack.c.b16 %v312, %v310
    %v341 = vpack.c.b16 %v313, %v311
    %v342 = vpack.c.b16 %v316, %v314
    %v343 = vpack.c.b16 %v317, %v315
    %v344 = vpack.c.b16 %v320, %v318
    %v345 = vpack.c.b16 %v321, %v319
    %v346 = vpack.c.b16 %v324, %v322
    %v347 = vpack.c.b16 %v325, %v323
    %v348 = vpack.c.b16 %v328, %v326
    %v349 = vpack.c.b16 %v329, %v327
    %v350 = vpack.c.b16 %v332, %v330
    %v351 = vpack.c.b16 %v333, %v331
    %v352 = vpack.c.b16 %v336, %v334
    %v353 = vpack.c.b16 %v337, %v335
    %370 = vmatpush.bf16.msra.mxu0 %v352
    %371 = vmatpush.bf16.msra.mxu0 %v350
    %372 = vmatpush.bf16.msra.mxu0 %v348
    %373 = vmatpush.bf16.msra.mxu0 %v346
    %374 = vmatpush.bf16.msra.mxu0 %v344
    %375 = vmatpush.bf16.msra.mxu0 %v342
    %376 = vmatpush.bf16.msra.mxu0 %v340
    %377 = vmatpush.bf16.msra.mxu0 %v338
    %378 = vmatmul.bf16.gmra.mxu0 %v267
    %v379 = vpop.f32.mrf.mxu0
    %v380 = vadd.f32 %v286, %v379
    %v381 = vpop.f32.mrf.mxu0
    %382 = vdwg.mxu0
    %383 = vmatpush.bf16.msra.mxu0 %v353
    %384 = vmatpush.bf16.msra.mxu0 %v351
    %385 = vmatpush.bf16.msra.mxu0 %v349
    %386 = vmatpush.bf16.msra.mxu0 %v347
    %387 = vmatpush.bf16.msra.mxu0 %v345
    %388 = vmatpush.bf16.msra.mxu0 %v343
    %389 = vmatpush.bf16.msra.mxu0 %v341
    %390 = vmatpush.bf16.msra.mxu0 %v339
    %391 = vmatmul.bf16.gmra.mxu0 %v267
    %v392 = vpop.f32.mrf.mxu0
    %v393 = vadd.f32 %v287, %v392
    %v394 = vpop.f32.mrf.mxu0
    %395 = vdwg.mxu0
    %396 = vadd.xlane.f32.xlu0 %v380
    %v397 = vpop.xlane.xlu0 %396
    %v398 = vmul.f32 %v397, 0.125
    %v399 = vsub.f32 %v380, %v398
    %401 = vset.pattern.permute.xlu0 0
    %402 = vperm.xlu0 %401, %v393
    %v403 = vpop.permute.xlu0 %402
    %v405 = vadd.f32 %v403, %v399
    %406 = vst [vmem:[#allocation11] sm:$0xff] %v405
    // Predicated region
    $region50: #{tpu_custom_call.1} parent=1 // pred_check
      _
    $region51: #{tpu_custom_call.1} parent=1 // pred_check_branch
      %408 = sbr.rel (0) target = $region53
    $region52: #{tpu_custom_call.1} parent=1 // pred_region
      %410 = vsyncadd [#allocation4], 0
      %s412 = sshll.u32 [#allocation11], 4
      %s413 = int_to_ptr.vmem [resolvable:$true] %s412
      %s414 = sshll.u32 %s7, 4
      %s415 = int_to_ptr.hbm [resolvable:$true] %s414
      %417 = dma.vmem_to_hbm [thread:$0]  %s413, 128, %s415, [#allocation4]
    $region53: #{tpu_custom_call.1} parent=1 // pred_fallthru
      _
    // Predicated region
    $region54: #{tpu_custom_call.1} parent=1 // pred_check
      _
    $region55: #{tpu_custom_call.1} parent=1 // pred_check_branch
      %419 = sbr.rel (0) target = $region57
    $region56: #{tpu_custom_call.1} parent=1 // pred_region
      %421 = dma.done [#allocation4], 128
    $region57: #{tpu_custom_call.1} parent=1 // pred_fallthru
      _
    %422 = vsyncpa [#allocation3], 1
    %423 = vsyncpa [#allocation6], 1
    %424 = vsyncpa [#allocation9], 1
    %425 = vsyncpa [#allocation4], 1

</llo_original>
